<compile_context>
chip_gen: v7x
topology: tpu7x:2x2x1
jax: 0.10.0
libtpu: 0.0.40
codegen_flags: <defaults>
</compile_context>

<pallas_src>
import jax
import jax.numpy as jnp
from jax.experimental import pallas as pl
from jax.experimental.pallas import tpu as pltpu


def _sigmoid_kernel(x_ref, o_ref):
    x = x_ref[...]
    # Direct sigmoid: exp -> EUP slot, add/div -> VPU.  Exact semantics of
    # torch.nn.Sigmoid / jax.nn.sigmoid to within a few f32 ulp.
    o_ref[...] = 1.0 / (1.0 + jnp.exp(-x))


def _sigmoid_pallas(x):
    """Elementwise sigmoid matching torch.nn.Sigmoid on an NCHW tensor."""
    n, c, h, w = x.shape
    # Drop the degenerate spatial dims only: (1, C, 1, 1) -> (1, C).
    # This is a free metadata change (no relayout copy), and the lane axis
    # is the C dim -> dense 128-lane groups inside the kernel.
    x2d = x.reshape(n, c * h * w)

    out2d = pl.pallas_call(
        _sigmoid_kernel,
        out_shape=jax.ShapeDtypeStruct(x2d.shape, x2d.dtype),
        in_specs=[pl.BlockSpec(memory_space=pltpu.MemorySpace.VMEM)],
        out_specs=pl.BlockSpec(memory_space=pltpu.MemorySpace.VMEM),
        input_output_aliases={0: 0},  # output reuses the input buffer
    )(x2d)

    # Back to NCHW (again a pure metadata reshape).
    return out2d.reshape(n, c, h, w)


# Donate the argument so the input_output_aliases buffer reuse is real
# (no defensive copy inserted by XLA).
sigmoid_pallas = jax.jit(_sigmoid_pallas, donate_argnums=0)


if __name__ == "__main__":
    key = jax.random.PRNGKey(0)
    # Matches the module's input: torch.randn([1, 1152, 1, 1])
    x238 = jax.random.normal(key, (1, 1152, 1, 1), dtype=jnp.float32)

    # Compute the reference BEFORE calling the donating kernel.
    y_ref = jax.nn.sigmoid(x238)

    y = sigmoid_pallas(x238)   # x238 is donated here; do not reuse it below
    jax.block_until_ready(y)

    assert y.shape == (1, 1152, 1, 1)
    assert y.dtype == jnp.float32
    assert jnp.allclose(y, y_ref, atol=1e-6, rtol=1e-6)

    print("KERNEL_OK")
</pallas_src>

<mosaic_0001>
module attributes {stable_mosaic.version = 11 : i64} {
  func.func @_sigmoid_kernel(%arg0: memref<1x1152xf32, #tpu.memory_space<vmem>>, %arg1: memref<1x1152xf32, #tpu.memory_space<vmem>>) attributes {dimension_semantics = [], scalar_prefetch = 0 : i64, scratch_operands = 0 : i64, tpu.core_type = #tpu.core_type<tc>} {
    %c0 = arith.constant 0 : index
    %c0_0 = arith.constant 0 : index
    %0 = vector.load %arg0[%c0, %c0_0] : memref<1x1152xf32, #tpu.memory_space<vmem>>, vector<1x1152xf32>
    %cst = arith.constant 0.000000e+00 : f32
    %1 = vector.broadcast %cst : f32 to vector<1x1152xf32>
    %2 = arith.subf %1, %0 : vector<1x1152xf32>
    %3 = math.exp %2 : vector<1x1152xf32>
    %cst_1 = arith.constant 1.000000e+00 : f32
    %4 = vector.broadcast %cst_1 : f32 to vector<1x1152xf32>
    %5 = arith.addf %4, %3 : vector<1x1152xf32>
    %cst_2 = arith.constant 1.000000e+00 : f32
    %6 = vector.broadcast %cst_2 : f32 to vector<1x1152xf32>
    %7 = arith.divf %6, %5 : vector<1x1152xf32>
    %c0_3 = arith.constant 0 : index
    %c0_4 = arith.constant 0 : index
    %8 = vector.load %arg1[%c0_3, %c0_4] : memref<1x1152xf32, #tpu.memory_space<vmem>>, vector<1x1152xf32>
    tpu.vector_store %arg1[%c0_3, %c0_4], %7 {strides = array<i32>} : memref<1x1152xf32, #tpu.memory_space<vmem>>, vector<1x1152xf32>,
    return
  }
}

</mosaic_0001>

<llo_original>
// kernel: _sigmoid_pallas.1
$region0: #{_sigmoid_pallas.1}
  #allocation0 [shape = 'u32[]', space=smem, size = 0x4, offset = 0x4, fixed_abs, tag = 'smem constant byte address 0x4 - core index']
  #allocation1 [shape = 'u32[144,128]{1,0:T(1,128)}', space=vmem, size = 0x12000, scoped, tag = 'internal scratch']
  %s0 = inlined_call_operand.hbm [shape: f32[1,1152], index: 0, kind: input, shape index: {}, may-alias: {0,1}]
  %s1 = inlined_call_operand.hbm [shape: f32[1,1152], index: 1, kind: output, shape index: {}, may-alias: {0,1}]
  %s2 = sld [smem:[#allocation0]]
  $region18: #{_sigmoid_pallas.1} parent=0
    _
  %s4 = ssub.s32 1, %s2
  %s5 = scalar_select 0, %s4, %s2
  $region1: #{_sigmoid_pallas.1} parent=0
    #allocation2 [shape = 'u8[4608]{0}', space=vmem, size = 0x1400, scoped, tag = 'input window, operand 0, single buffered']
    #allocation3 [shape = 's32[1]{0}', space=sflag, size = 0x4, scoped, tag = 'scoped memory for _sigmoid_pallas.1']
    #allocation4 [shape = 's32[1]{0}', space=sflag, size = 0x4, scoped, tag = 'scoped memory for _sigmoid_pallas.1']
    #allocation5 [shape = 'u8[4608]{0}', space=vmem, size = 0x1400, scoped, tag = 'output window, operand 0, single buffered']
    %6 = vsyncpa [#allocation3], 0
    %7 = vsyncpa [#allocation4], 0
    // Predicated region
    $region2: #{_sigmoid_pallas.1} parent=1 // pred_check
      _
    $region3: #{_sigmoid_pallas.1} parent=1 // pred_check_branch
      %9 = sbr.rel (0) target = $region5
    $region4: #{_sigmoid_pallas.1} parent=1 // pred_region
      %s11 = ssub.s32 144, 144
      %12 = vsyncadd [#allocation3], %s11
      %s14 = sshll.u32 [#allocation2], 4
      %s15 = int_to_ptr.vmem [resolvable:$true] %s14
      %17 = dma.hbm_to_vmem [thread:$0]  %s0, 144, %s15, [#allocation3]
    $region5: #{_sigmoid_pallas.1} parent=1 // pred_fallthru
      _
    // Predicated region
    $region6: #{_sigmoid_pallas.1} parent=1 // pred_check
      _
    $region7: #{_sigmoid_pallas.1} parent=1 // pred_check_branch
      %19 = sbr.rel (0) target = $region9
    $region8: #{_sigmoid_pallas.1} parent=1 // pred_region
      %20 = dma.done [#allocation3], 144
    $region9: #{_sigmoid_pallas.1} parent=1 // pred_fallthru
      _
    %v21 = vld [vmem:[#allocation2] sm:$0xff]
    %v22 = vld [vmem:[#allocation2 + $0x8] sm:$0x1]
    %v23 = vsub.f32 0.0, %v21
    %v24 = vsub.f32 0.0, %v22
    %v25 = vmul.f32 %v23, 1.442695
    %v26 = vpow.pop %v25
    %v27 = vmul.f32 %v24, 1.442695
    %v28 = vpow.pop %v27
    %v29 = vadd.f32 %v26, 1.0
    %v30 = vadd.f32 %v28, 1.0
    %v31 = vrcp.pop %v29
    %v32 = vmul.f32 1.0, %v31
    %v33 = vrcp.pop %v30
    %v34 = vmul.f32 1.0, %v33
    %35 = vst [vmem:[#allocation5] sm:$0xff] %v32
    %v36 = vlaneseq
    %vm37 = vcmp.ge.s32.totalorder %v36, 0
    %vm38 = vcmp.lt.s32.totalorder %v36, 128
    %vm39 = vmand %vm37, %vm38
    %40 = vst.msk [vmem:[#allocation5 + $0x8] sm:$0x1] %vm39, %v34
    // Predicated region
    $region10: #{_sigmoid_pallas.1} parent=1 // pred_check
      _
    $region11: #{_sigmoid_pallas.1} parent=1 // pred_check_branch
      %42 = sbr.rel (0) target = $region13
    $region12: #{_sigmoid_pallas.1} parent=1 // pred_region
      %s44 = ssub.s32 144, 144
      %45 = vsyncadd [#allocation4], %s44
      %s47 = sshll.u32 [#allocation5], 4
      %s48 = int_to_ptr.vmem [resolvable:$true] %s47
      %50 = dma.vmem_to_hbm [thread:$0]  %s48, 144, %s1, [#allocation4]
    $region13: #{_sigmoid_pallas.1} parent=1 // pred_fallthru
      _
    // Predicated region
    $region14: #{_sigmoid_pallas.1} parent=1 // pred_check
      _
    $region15: #{_sigmoid_pallas.1} parent=1 // pred_check_branch
      %52 = sbr.rel (0) target = $region17
    $region16: #{_sigmoid_pallas.1} parent=1 // pred_region
      %53 = dma.done [#allocation4], 144
    $region17: #{_sigmoid_pallas.1} parent=1 // pred_fallthru
      _
    %54 = vsyncpa [#allocation3], 1
    %55 = vsyncpa [#allocation4], 1

</llo_original>
